<compile_context>
chip_gen: v6e
topology: v6e:2x2x1
jax: 0.10.0
libtpu: 0.0.40
codegen_flags: <defaults>
</compile_context>

<pallas_src>
import functools

import jax
import jax.numpy as jnp
from jax.experimental import pallas as pl
from jax.experimental.pallas import tpu as pltpu

IGNORE_INDEX = -100  # cfg.LOSS.CrossEntropyLoss.IGNORE_INDEX default


# ----------------------------------------------------------------------------
# Kernel
# ----------------------------------------------------------------------------
def _ce_kernel(logits_ref, tgt_ref, part_ref, *, ignore_index, num_classes,
               height, tile_h, chunk_h, class_unroll_limit=32):
    """One (sample, row-block) step: write a (chunk_h, W) partial loss sum."""
    h_blk = pl.program_id(1)
    ragged = (height % tile_h) != 0
    num_chunks = tile_h // chunk_h

    # Each grid step owns a unique output block: zero it, then accumulate the
    # per-chunk partials into it (lane-dense vst, tiny writeback per step).
    part_ref[...] = jnp.zeros_like(part_ref)

    def chunk_body(ci):
        row0 = ci * chunk_h
        if not isinstance(ci, int):
            row0 = pl.multiple_of(row0, chunk_h)

        # Labels: widen once per chunk, in VMEM (HBM stream stays narrow).
        t32 = tgt_ref[0, pl.ds(row0, chunk_h), :].astype(jnp.int32)
        valid = t32 != ignore_index
        if ragged:
            row = jax.lax.broadcasted_iota(jnp.int32, t32.shape, 0)
            valid = valid & ((h_blk * tile_h + row0 + row) < height)

        def read_class(c_idx):
            return logits_ref[0, c_idx, pl.ds(row0, chunk_h), :]

        if num_classes <= class_unroll_limit:
            # --- class max pass in the input dtype (exact; no per-class cast)
            m = read_class(0)
            for c_idx in range(1, num_classes):
                m = jnp.maximum(m, read_class(c_idx))
            m32 = m.astype(jnp.float32)

            # --- sum of exp(x - m) and target-class pick, elementwise per class
            sexp = jnp.zeros_like(m32)
            picked = jnp.zeros_like(m32)
            for c_idx in range(num_classes):
                xc = read_class(c_idx).astype(jnp.float32)
                sexp = sexp + jnp.exp(xc - m32)
                picked = jnp.where(t32 == c_idx, xc, picked)
        else:
            # Large C: partially-unrolled loops keep code size bounded.
            m = jax.lax.fori_loop(
                1, num_classes,
                lambda c_idx, mm: jnp.maximum(mm, read_class(c_idx)),
                read_class(0), unroll=4)
            m32 = m.astype(jnp.float32)

            def exp_body(c_idx, carry):
                sexp_c, picked_c = carry
                xc = read_class(c_idx).astype(jnp.float32)
                return (sexp_c + jnp.exp(xc - m32),
                        jnp.where(t32 == c_idx, xc, picked_c))

            sexp, picked = jax.lax.fori_loop(
                0, num_classes, exp_body,
                (jnp.zeros_like(m32), jnp.zeros_like(m32)), unroll=4)

        # NOTE: labels out of range (>= C, or negative but != ignore_index)
        # leave picked == 0 -> loss = logsumexp for that pixel; PyTorch's
        # behavior there is undefined/raises.
        lse = m32 + jnp.log(sexp)
        per_pixel = jnp.where(valid, lse - picked, 0.0)   # select, not multiply
        part_ref[0, 0] += per_pixel

    if num_chunks == 1:
        chunk_body(0)
    else:
        @pl.loop(0, num_chunks)
        def _(ci):
            chunk_body(ci)


# ----------------------------------------------------------------------------
# Wrapper helpers
# ----------------------------------------------------------------------------
def _default_vmem_limit():
    cap = 64 * 1024 * 1024  # conservative fallback (covers v7x's 64 MiB)
    try:
        info = pltpu.get_tpu_info()
        cap = int(getattr(info, "vmem_capacity_bytes", cap))
    except Exception:
        pass
    return int(min(cap * 3 // 4, 96 * 1024 * 1024))


def _fold_spatial(h, w):
    """Fold (H, W) -> (H2, W2), H2*W2 == H*W, with W2 a multiple of 128 when
    possible. Row-major contiguous reshape => no data movement."""
    if w % 128 == 0:
        return h, w
    spatial = h * w
    cands = [128 * m for m in range(1, 33) if spatial % (128 * m) == 0]
    if not cands:
        # TODO(synk): pad W (with ignore_index labels) when H*W has no
        # multiple-of-128 divisor; such small-W inputs currently run lane-sparse.
        return h, w
    small = [d for d in cands if d <= 512]
    w2 = max(small) if small else min(cands)
    return spatial // w2, w2


def _plan_tiling(h2, w2, c, itemsize, block_bytes, tile_h_req=None):
    """Return (tile_h, chunk_h): tile_h rows per logits block (multiple of
    chunk_h), chunk_h rows per inner vreg-resident chunk (multiple of 8)."""
    if h2 <= 8:
        return h2, h2
    # ~4K elements per chunk slab so the ~6 live slabs stay in vregs.
    ch = max(8, min(256, (4096 // max(1, w2)) // 8 * 8))
    ch = min(ch, -(-h2 // 8) * 8)
    if tile_h_req is not None:
        tile_h = max(8, (int(tile_h_req) // 8) * 8)
        ch = min(ch, tile_h)
        while tile_h % ch:
            ch -= 8
    else:
        rows = block_bytes // max(1, c * w2 * itemsize)
        tile_h = max(ch, (rows // ch) * ch)
    tile_h = min(tile_h, -(-h2 // ch) * ch)
    return tile_h, ch


# ----------------------------------------------------------------------------
# Public entry point
# ----------------------------------------------------------------------------
def cross_entropy_loss(pred, target, *, ignore_index=IGNORE_INDEX,
                       tile_h=None, block_bytes=None):
    """pred: (N, C, H, W) float logits (f32 or bf16); target: (N, H, W) int labels.

    Returns a scalar f32 — mean CE over non-ignored pixels (PyTorch semantics;
    NaN if every pixel is ignored, like PyTorch). Pass bf16 logits and/or
    narrow integer labels directly: both stream at their stored width and are
    widened in VMEM inside the kernel.
    """
    n, c, h, w = pred.shape
    assert target.shape == (n, h, w)

    # Narrow label dtypes pass straight through (int8/int16 hold -100 fine).
    if jnp.issubdtype(target.dtype, jnp.signedinteger):
        tgt = target
    else:
        tgt = target.astype(jnp.int32)

    # Lane-dense spatial folding (free reshape; per-pixel math is unaffected).
    h2, w2 = _fold_spatial(h, w)
    pred2 = pred.reshape(n, c, h2, w2)
    tgt2 = tgt.reshape(n, h2, w2)

    vmem_limit = _default_vmem_limit()
    if block_bytes is None:
        block_bytes = min(8 * 1024 * 1024, vmem_limit // 6)
    itemsize = jnp.dtype(pred.dtype).itemsize
    tile_h2, chunk_h = _plan_tiling(h2, w2, c, itemsize, block_bytes, tile_h)

    hb = pl.cdiv(h2, tile_h2)
    grid = (n, hb)

    partials = pl.pallas_call(
        functools.partial(_ce_kernel, ignore_index=ignore_index,
                          num_classes=c, height=h2, tile_h=tile_h2,
                          chunk_h=chunk_h),
        out_shape=jax.ShapeDtypeStruct((n, hb, chunk_h, w2), jnp.float32),
        grid_spec=pltpu.PrefetchScalarGridSpec(
            num_scalar_prefetch=0,
            grid=grid,
            in_specs=[
                # NCHW logits read in place: one (1, C, TILE_H, W) block/step.
                pl.BlockSpec((1, c, tile_h2, w2), lambda i, j: (i, 0, j, 0)),
                pl.BlockSpec((1, tile_h2, w2), lambda i, j: (i, j, 0)),
            ],
            # One small partial-sum block per grid step -> both axes parallel.
            out_specs=pl.BlockSpec((1, 1, chunk_h, w2),
                                   lambda i, j: (i, j, 0, 0)),
        ),
        compiler_params=pltpu.CompilerParams(
            dimension_semantics=("parallel", "parallel"),
            vmem_limit_bytes=vmem_limit,
        ),
    )(pred2, tgt2)

    # Tiny final reductions in plain XLA.
    total = jnp.sum(partials)
    count = jnp.sum((target != ignore_index).astype(jnp.float32))
    return total / count


# ----------------------------------------------------------------------------
# Reference + tests
# ----------------------------------------------------------------------------
def _reference_ce(pred, target, ignore_index=IGNORE_INDEX):
    n, c, h, w = pred.shape
    logits = jnp.transpose(pred, (0, 2, 3, 1)).reshape(-1, c).astype(jnp.float32)
    tgt = target.reshape(-1).astype(jnp.int32)
    logp = jax.nn.log_softmax(logits, axis=-1)
    picked = jnp.take_along_axis(logp, jnp.clip(tgt, 0, c - 1)[:, None], axis=-1)[:, 0]
    valid = tgt != ignore_index
    return -jnp.sum(jnp.where(valid, picked, 0.0)) / jnp.sum(valid.astype(jnp.float32))


if __name__ == "__main__":
    key = jax.random.PRNGKey(0)
    k1, k2, k3, k4, k5, k6, k7 = jax.random.split(key, 7)

    # Test 1: (2, 4, 16, 16) f32 logits, ~10% ignored pixels.
    # Spatial folds to (1, 256): lane-dense path, single chunk.
    N, C, H, W = 2, 4, 16, 16
    pred = jax.random.normal(k1, (N, C, H, W), dtype=jnp.float32)
    target = jax.random.randint(k2, (N, H, W), 0, C, dtype=jnp.int32)
    target = jnp.where(jax.random.bernoulli(k3, 0.1, (N, H, W)), IGNORE_INDEX, target)
    loss = jax.block_until_ready(cross_entropy_loss(pred, target))
    ref = _reference_ce(pred, target)
    assert jnp.allclose(loss, ref, atol=1e-4, rtol=1e-4), (loss, ref)

    # Test 2: ragged H (20 rows, explicit tile_h=8 -> masked boundary block),
    # bf16 logits fed straight through, small non-foldable W (lane-sparse path).
    H2 = 20
    pred2 = jax.random.normal(k4, (N, C, H2, W), dtype=jnp.bfloat16)
    target2 = jax.random.randint(k5, (N, H2, W), 0, C, dtype=jnp.int32)
    target2 = target2.at[0, H2 - 1, :].set(IGNORE_INDEX)
    loss2 = jax.block_until_ready(cross_entropy_loss(pred2, target2, tile_h=8))
    ref2 = _reference_ce(pred2, target2)
    assert jnp.allclose(loss2, ref2, atol=1e-4, rtol=1e-4), (loss2, ref2)

    # Test 3: (1, 3, 56, 128) f32 — exercises the inner row-chunk loop
    # (2 chunks per block) and the ragged row mask inside a chunk, with N=1.
    N3, C3, H3, W3 = 1, 3, 56, 128
    pred3 = jax.random.normal(k6, (N3, C3, H3, W3), dtype=jnp.float32)
    target3 = jax.random.randint(k7, (N3, H3, W3), 0, C3, dtype=jnp.int32)
    target3 = target3.at[0, :2, :].set(IGNORE_INDEX)
    loss3 = jax.block_until_ready(cross_entropy_loss(pred3, target3))
    ref3 = _reference_ce(pred3, target3)
    assert jnp.allclose(loss3, ref3, atol=1e-4, rtol=1e-4), (loss3, ref3)

    print("KERNEL_OK")
</pallas_src>

<mosaic_0001>
module attributes {stable_mosaic.version = 11 : i64} {
  func.func @_ce_kernel(%arg0: i32, %arg1: i32, %arg2: memref<1x4x1x256xf32, #tpu.memory_space<vmem>>, %arg3: memref<1x1x256xi32, #tpu.memory_space<vmem>>, %arg4: memref<1x1x1x256xf32, #tpu.memory_space<vmem>>) attributes {dimension_semantics = [#tpu.dimension_semantics<parallel>, #tpu.dimension_semantics<parallel>], iteration_bounds = array<i64: 2, 1>, scalar_prefetch = 0 : i64, scratch_operands = 0 : i64, tpu.core_type = #tpu.core_type<tc>, window_params = [{transform_indices = @transform_0, window_bounds = array<i64: 1, 4, 1, 256>}, {transform_indices = @transform_1, window_bounds = array<i64: 1, 1, 256>}, {transform_indices = @transform_2, window_bounds = array<i64: 1, 1, 1, 256>}]} {
    %cst = arith.constant 0.000000e+00 : f32
    %0 = vector.broadcast %cst : f32 to vector<1x1x1x256xf32>
    %c0 = arith.constant 0 : index
    %c0_0 = arith.constant 0 : index
    %c0_1 = arith.constant 0 : index
    %c0_2 = arith.constant 0 : index
    %1 = vector.load %arg4[%c0, %c0_0, %c0_1, %c0_2] : memref<1x1x1x256xf32, #tpu.memory_space<vmem>>, vector<1x1x1x256xf32>
    tpu.vector_store %arg4[%c0, %c0_0, %c0_1, %c0_2], %0 {strides = array<i32>} : memref<1x1x1x256xf32, #tpu.memory_space<vmem>>, vector<1x1x1x256xf32>,
    %c0_3 = arith.constant 0 : index
    %c0_4 = arith.constant 0 : index
    %c0_5 = arith.constant 0 : index
    %2 = vector.load %arg3[%c0_3, %c0_4, %c0_5] : memref<1x1x256xi32, #tpu.memory_space<vmem>>, vector<1x1x256xi32>
    %3 = vector.shape_cast %2 : vector<1x1x256xi32> to vector<1x256xi32>
    %c-100_i32 = arith.constant -100 : i32
    %4 = vector.broadcast %c-100_i32 : i32 to vector<1x256xi32>
    %5 = arith.cmpi ne, %3, %4 : vector<1x256xi32>
    %c0_6 = arith.constant 0 : index
    %c0_7 = arith.constant 0 : index
    %c0_8 = arith.constant 0 : index
    %c0_9 = arith.constant 0 : index
    %6 = vector.load %arg2[%c0_6, %c0_7, %c0_8, %c0_9] : memref<1x4x1x256xf32, #tpu.memory_space<vmem>>, vector<1x1x1x256xf32>
    %7 = vector.shape_cast %6 : vector<1x1x1x256xf32> to vector<1x256xf32>
    %c0_10 = arith.constant 0 : index
    %c1 = arith.constant 1 : index
    %c0_11 = arith.constant 0 : index
    %c0_12 = arith.constant 0 : index
    %8 = vector.load %arg2[%c0_10, %c1, %c0_11, %c0_12] : memref<1x4x1x256xf32, #tpu.memory_space<vmem>>, vector<1x1x1x256xf32>
    %9 = vector.shape_cast %8 : vector<1x1x1x256xf32> to vector<1x256xf32>
    %10 = arith.maximumf %7, %9 : vector<1x256xf32>
    %c0_13 = arith.constant 0 : index
    %c2 = arith.constant 2 : index
    %c0_14 = arith.constant 0 : index
    %c0_15 = arith.constant 0 : index
    %11 = vector.load %arg2[%c0_13, %c2, %c0_14, %c0_15] : memref<1x4x1x256xf32, #tpu.memory_space<vmem>>, vector<1x1x1x256xf32>
    %12 = vector.shape_cast %11 : vector<1x1x1x256xf32> to vector<1x256xf32>
    %13 = arith.maximumf %10, %12 : vector<1x256xf32>
    %c0_16 = arith.constant 0 : index
    %c3 = arith.constant 3 : index
    %c0_17 = arith.constant 0 : index
    %c0_18 = arith.constant 0 : index
    %14 = vector.load %arg2[%c0_16, %c3, %c0_17, %c0_18] : memref<1x4x1x256xf32, #tpu.memory_space<vmem>>, vector<1x1x1x256xf32>
    %15 = vector.shape_cast %14 : vector<1x1x1x256xf32> to vector<1x256xf32>
    %16 = arith.maximumf %13, %15 : vector<1x256xf32>
    %cst_19 = arith.constant 0.000000e+00 : f32
    %17 = vector.broadcast %cst_19 : f32 to vector<1x256xf32>
    %cst_20 = arith.constant 0.000000e+00 : f32
    %18 = vector.broadcast %cst_20 : f32 to vector<1x256xf32>
    %c0_21 = arith.constant 0 : index
    %c0_22 = arith.constant 0 : index
    %c0_23 = arith.constant 0 : index
    %c0_24 = arith.constant 0 : index
    %19 = vector.load %arg2[%c0_21, %c0_22, %c0_23, %c0_24] : memref<1x4x1x256xf32, #tpu.memory_space<vmem>>, vector<1x1x1x256xf32>
    %20 = vector.shape_cast %19 : vector<1x1x1x256xf32> to vector<1x256xf32>
    %21 = arith.subf %20, %16 : vector<1x256xf32>
    %22 = math.exp %21 : vector<1x256xf32>
    %23 = arith.addf %17, %22 : vector<1x256xf32>
    %c0_i32 = arith.constant 0 : i32
    %24 = vector.broadcast %c0_i32 : i32 to vector<1x256xi32>
    %25 = arith.cmpi eq, %3, %24 : vector<1x256xi32>
    %26 = arith.select %25, %20, %18 : vector<1x256xi1>, vector<1x256xf32>
    %c0_25 = arith.constant 0 : index
    %c1_26 = arith.constant 1 : index
    %c0_27 = arith.constant 0 : index
    %c0_28 = arith.constant 0 : index
    %27 = vector.load %arg2[%c0_25, %c1_26, %c0_27, %c0_28] : memref<1x4x1x256xf32, #tpu.memory_space<vmem>>, vector<1x1x1x256xf32>
    %28 = vector.shape_cast %27 : vector<1x1x1x256xf32> to vector<1x256xf32>
    %29 = arith.subf %28, %16 : vector<1x256xf32>
    %30 = math.exp %29 : vector<1x256xf32>
    %31 = arith.addf %23, %30 : vector<1x256xf32>
    %c1_i32 = arith.constant 1 : i32
    %32 = vector.broadcast %c1_i32 : i32 to vector<1x256xi32>
    %33 = arith.cmpi eq, %3, %32 : vector<1x256xi32>
    %34 = arith.select %33, %28, %26 : vector<1x256xi1>, vector<1x256xf32>
    %c0_29 = arith.constant 0 : index
    %c2_30 = arith.constant 2 : index
    %c0_31 = arith.constant 0 : index
    %c0_32 = arith.constant 0 : index
    %35 = vector.load %arg2[%c0_29, %c2_30, %c0_31, %c0_32] : memref<1x4x1x256xf32, #tpu.memory_space<vmem>>, vector<1x1x1x256xf32>
    %36 = vector.shape_cast %35 : vector<1x1x1x256xf32> to vector<1x256xf32>
    %37 = arith.subf %36, %16 : vector<1x256xf32>
    %38 = math.exp %37 : vector<1x256xf32>
    %39 = arith.addf %31, %38 : vector<1x256xf32>
    %c2_i32 = arith.constant 2 : i32
    %40 = vector.broadcast %c2_i32 : i32 to vector<1x256xi32>
    %41 = arith.cmpi eq, %3, %40 : vector<1x256xi32>
    %42 = arith.select %41, %36, %34 : vector<1x256xi1>, vector<1x256xf32>
    %c0_33 = arith.constant 0 : index
    %c3_34 = arith.constant 3 : index
    %c0_35 = arith.constant 0 : index
    %c0_36 = arith.constant 0 : index
    %43 = vector.load %arg2[%c0_33, %c3_34, %c0_35, %c0_36] : memref<1x4x1x256xf32, #tpu.memory_space<vmem>>, vector<1x1x1x256xf32>
    %44 = vector.shape_cast %43 : vector<1x1x1x256xf32> to vector<1x256xf32>
    %45 = arith.subf %44, %16 : vector<1x256xf32>
    %46 = math.exp %45 : vector<1x256xf32>
    %47 = arith.addf %39, %46 : vector<1x256xf32>
    %c3_i32 = arith.constant 3 : i32
    %48 = vector.broadcast %c3_i32 : i32 to vector<1x256xi32>
    %49 = arith.cmpi eq, %3, %48 : vector<1x256xi32>
    %50 = arith.select %49, %44, %42 : vector<1x256xi1>, vector<1x256xf32>
    %51 = math.log %47 : vector<1x256xf32>
    %52 = arith.addf %16, %51 : vector<1x256xf32>
    %53 = arith.subf %52, %50 : vector<1x256xf32>
    %cst_37 = arith.constant 0.000000e+00 : f32
    %54 = vector.broadcast %cst_37 : f32 to vector<1x256xf32>
    %55 = arith.select %5, %53, %54 : vector<1x256xi1>, vector<1x256xf32>
    %c0_38 = arith.constant 0 : index
    %c0_39 = arith.constant 0 : index
    %c0_40 = arith.constant 0 : index
    %c0_41 = arith.constant 0 : index
    %56 = vector.load %arg4[%c0_38, %c0_39, %c0_40, %c0_41] : memref<1x1x1x256xf32, #tpu.memory_space<vmem>>, vector<1x1x1x256xf32>
    %57 = vector.shape_cast %56 : vector<1x1x1x256xf32> to vector<1x256xf32>
    %58 = arith.addf %57, %55 : vector<1x256xf32>
    %c0_42 = arith.constant 0 : index
    %c0_43 = arith.constant 0 : index
    %c0_44 = arith.constant 0 : index
    %c0_45 = arith.constant 0 : index
    %59 = vector.load %arg4[%c0_42, %c0_43, %c0_44, %c0_45] : memref<1x1x1x256xf32, #tpu.memory_space<vmem>>, vector<1x1x1x256xf32>
    %60 = vector.shape_cast %59 : vector<1x1x1x256xf32> to vector<1x256xf32>
    %61 = vector.shape_cast %58 : vector<1x256xf32> to vector<1x1x1x256xf32>
    tpu.vector_store %arg4[%c0_42, %c0_43, %c0_44, %c0_45], %61 {strides = array<i32>} : memref<1x1x1x256xf32, #tpu.memory_space<vmem>>, vector<1x1x1x256xf32>,
    return
  }
  func.func @transform_0(%arg0: i32, %arg1: i32) -> (i32, i32, i32, i32) {
    %c0_i32 = arith.constant 0 : i32
    %c0_i32_0 = arith.constant 0 : i32
    %c0_i32_1 = arith.constant 0 : i32
    return %arg0, %c0_i32, %arg1, %c0_i32_0 : i32, i32, i32, i32
  }
  func.func @transform_1(%arg0: i32, %arg1: i32) -> (i32, i32, i32) {
    %c0_i32 = arith.constant 0 : i32
    %c0_i32_0 = arith.constant 0 : i32
    return %arg0, %arg1, %c0_i32 : i32, i32, i32
  }
  func.func @transform_2(%arg0: i32, %arg1: i32) -> (i32, i32, i32, i32) {
    %c0_i32 = arith.constant 0 : i32
    %c0_i32_0 = arith.constant 0 : i32
    %c0_i32_1 = arith.constant 0 : i32
    return %arg0, %arg1, %c0_i32, %c0_i32_0 : i32, i32, i32, i32
  }
}

</mosaic_0001>

<llo_original>
// kernel: tpu_custom_call.1
$region0: #{tpu_custom_call.1}
  #allocation0 [shape = 'u32[]', space=smem, size = 0x4, offset = 0x4, fixed_abs, tag = 'smem constant byte address 0x4 - core index']
  #allocation1 [shape = 'u32[144,128]{1,0:T(1,128)}', space=vmem, size = 0x12000, scoped, tag = 'internal scratch']
  %s0 = inlined_call_operand.hbm [shape: f32[2,4,1,256], index: 0, kind: input, shape index: {}]
  %s1 = inlined_call_operand.hbm [shape: s32[2,1,256], index: 1, kind: input, shape index: {}]
  %s2 = inlined_call_operand.hbm [shape: f32[2,1,1,256], index: 2, kind: output, shape index: {}]
  %s3 = sld [smem:[#allocation0]]
  $region49: #{tpu_custom_call.1} parent=0
    _
  %s5 = ssub.s32 1, %s3
  %s6 = scalar_select 0, %s5, %s3
  $region1: #{tpu_custom_call.1} parent=0
    #allocation2 [shape = 'u8[8192]{0}', space=vmem, size = 0x2000, scoped, tag = 'input window, operand 0']
    #allocation3 [shape = 's32[2]{0}', space=sflag, size = 0x8, scoped, tag = 'scoped memory for tpu_custom_call.1']
    #allocation4 [shape = 's32[2]{0}', space=sflag, size = 0x8, scoped, tag = 'scoped memory for tpu_custom_call.1']
    #allocation5 [shape = 'u8[2048]{0}', space=vmem, size = 0x800, scoped, tag = 'input window, operand 1']
    #allocation6 [shape = 's32[2]{0}', space=sflag, size = 0x8, scoped, tag = 'scoped memory for tpu_custom_call.1']
    #allocation7 [shape = 'u8[2048]{0}', space=vmem, size = 0x800, scoped, tag = 'output window, operand 0']
    %7 = vsyncpa [#allocation3], 0
    %s8 = scalar_lea.sflag [#allocation3], 1
    %9 = vsyncpa %s8, 0
    %10 = vsyncpa [#allocation6], 0
    %s11 = scalar_lea.sflag [#allocation6], 1
    %12 = vsyncpa %s11, 0
    %13 = vsyncpa [#allocation4], 0
    %s14 = scalar_lea.sflag [#allocation4], 1
    %15 = vsyncpa %s14, 0
    loop: start=0, step=1, limit=4
    $region2: #{tpu_custom_call.1} parent=1 // loop_pre_header
      _
    $region3: #{tpu_custom_call.1} parent=1 // loop_header
      %s17 = sphi 0, %s21
      %p18 = scmp.ge.s32.totalorder %s17, 4
      %s24 = sphi 0, %s36
      %s25 = sphi 0, %s32
      %s26 = sphi 0, %s24
      %s27 = sphi 0, %s25
      %s28 = sphi 0, %s26
      %s29 = sphi 0, %s27
      %s41 = sphi 0, %s43
      %s44 = sphi 0, %s41
      %s45 = sphi 0, %s44
      %s61 = sphi 0, %s45
      %s69 = sphi 0, %s71
      %s72 = sphi 0, %s69
      %s73 = sphi 0, %s72
      %s89 = sphi 0, %s73
      %s97 = sphi 0, %s99
      %s100 = sphi 0, %s97
      %s101 = sphi 0, %s100
      %s117 = sphi 0, %s101
    $region4: #{tpu_custom_call.1} parent=1 // loop_header_branch
      %20 = sbr.rel (%p18) target = $region8
    $region5: #{tpu_custom_call.1} parent=1 // loop_body
      %s22 = ssub.s32 %s17, 1
      %s23 = ssub.s32 %s17, 2
      %s30 = sadd.s32 1, %s25
      %p31 = scmp.ge.s32.totalorder %s30, 1
      %s32 = scalar_select %p31, 0, %s30
      %s33 = sadd.s32 1, %s24
      %s34 = scalar_select %p31, %s33, %s24
      %p35 = scmp.ge.s32.totalorder %s34, 2
      %s36 = scalar_select %p35, 0, %s34
      %s37 = ssub.s32 %s24, %s36
      %s38 = ssub.s32 %s25, %s32
      %s39 = sor.u32 %s37, %s38
      %p40 = scmp.eq.s32.totalorder %s39, 0
      %s42 = sadd.s32 %s41, 1
      %s43 = scalar_select %p40, %s41, %s42
      %p46 = pneg %p40
      %p47 = scmp.eq.s32.totalorder %s17, 1
      %p48 = por %p46, %p47
      %p49 = scmp.ne.s32.totalorder %s41, %s44
      %p50 = scmp.eq.s32.totalorder %s17, 0
      %p51 = por %p49, %p50
      %p52 = scmp.ne.s32.totalorder %s41, %s44
      %p53 = scmp.eq.s32.totalorder %s22, 1
      %p54 = por %p52, %p53
      %p55 = scmp.ne.s32.totalorder %s44, %s45
      %p56 = scmp.eq.s32.totalorder %s22, 0
      %p57 = por %p55, %p56
      %p58 = scmp.ne.s32.totalorder %s44, %s45
      %p59 = scmp.eq.s32.totalorder %s23, 1
      %p60 = por %p58, %p59
      %p62 = scmp.ne.s32.totalorder %s45, %s61
      %p63 = scmp.eq.s32.totalorder %s23, 0
      %p64 = por %p62, %p63
      %s65 = ssub.s32 %s24, %s36
      %s66 = ssub.s32 %s25, %s32
      %s67 = sor.u32 %s65, %s66
      %p68 = scmp.eq.s32.totalorder %s67, 0
      %s70 = sadd.s32 %s69, 1
      %s71 = scalar_select %p68, %s69, %s70
      %p74 = pneg %p68
      %p75 = scmp.eq.s32.totalorder %s17, 1
      %p76 = por %p74, %p75
      %p77 = scmp.ne.s32.totalorder %s69, %s72
      %p78 = scmp.eq.s32.totalorder %s17, 0
      %p79 = por %p77, %p78
      %p80 = scmp.ne.s32.totalorder %s69, %s72
      %p81 = scmp.eq.s32.totalorder %s22, 1
      %p82 = por %p80, %p81
      %p83 = scmp.ne.s32.totalorder %s72, %s73
      %p84 = scmp.eq.s32.totalorder %s22, 0
      %p85 = por %p83, %p84
      %p86 = scmp.ne.s32.totalorder %s72, %s73
      %p87 = scmp.eq.s32.totalorder %s23, 1
      %p88 = por %p86, %p87
      %p90 = scmp.ne.s32.totalorder %s73, %s89
      %p91 = scmp.eq.s32.totalorder %s23, 0
      %p92 = por %p90, %p91
      %s93 = ssub.s32 %s24, %s36
      %s94 = ssub.s32 %s25, %s32
      %s95 = sor.u32 %s93, %s94
      %p96 = scmp.eq.s32.totalorder %s95, 0
      %s98 = sadd.s32 %s97, 1
      %s99 = scalar_select %p96, %s97, %s98
      %p102 = pneg %p96
      %p103 = scmp.eq.s32.totalorder %s17, 1
      %p104 = por %p102, %p103
      %p105 = scmp.ne.s32.totalorder %s97, %s100
      %p106 = scmp.eq.s32.totalorder %s17, 0
      %p107 = por %p105, %p106
      %p108 = scmp.ne.s32.totalorder %s97, %s100
      %p109 = scmp.eq.s32.totalorder %s22, 1
      %p110 = por %p108, %p109
      %p111 = scmp.ne.s32.totalorder %s100, %s101
      %p112 = scmp.eq.s32.totalorder %s22, 0
      %p113 = por %p111, %p112
      %p114 = scmp.ne.s32.totalorder %s100, %s101
      %p115 = scmp.eq.s32.totalorder %s23, 1
      %p116 = por %p114, %p115
      %p118 = scmp.ne.s32.totalorder %s101, %s117
      %p119 = scmp.eq.s32.totalorder %s23, 0
      %p120 = por %p118, %p119
      %p121 = scmp.le.s32.totalorder 1, %s17
      %p122 = scmp.lt.s32.totalorder %s17, 3
      %p123 = pnand %p121, %p122
      %p124 = pneg %p123
      // Predicated region
      $region9: #{tpu_custom_call.1} parent=5 // pred_check
        _
      $region10: #{tpu_custom_call.1} parent=5 // pred_check_branch
        %126 = sbr.rel (%p123) target = $region12
      $region11: #{tpu_custom_call.1} parent=5 // pred_region
        %s127 = ssub.s32 %s17, 1
      $region12: #{tpu_custom_call.1} parent=5 // pred_fallthru
        _
      %p128 = scmp.lt.s32.totalorder %s17, 2
      // Predicated region
      $region13: #{tpu_custom_call.1} parent=5 // pred_check
        %p129 = pneg %p128
      $region14: #{tpu_custom_call.1} parent=5 // pred_check_branch
        %131 = sbr.rel (%p129) target = $region16
      $region15: #{tpu_custom_call.1} parent=5 // pred_region
        // Predicated region
        $region17: #{tpu_custom_call.1} parent=15 // pred_check
          %p132 = pneg %p51
        $region18: #{tpu_custom_call.1} parent=15 // pred_check_branch
          %134 = sbr.rel (%p132) target = $region20
        $region19: #{tpu_custom_call.1} parent=15 // pred_region
          %s135 = sand.u32 %s41, 1
          %s136 = scalar_lea.sflag [#allocation3], %s135
          %s137 = sand.u32 %s41, 1
          %s138 = smul.addr %s137, 8
          %s139 = scalar_lea.vmem [#allocation2], %s138
          %s141 = ssub.s32 128, 128
          %142 = vsyncadd %s136, %s141
          %s143 = smul.addr %s25, 2
          %s144 = smul.addr %s24, 8
          %s145 = sadd.s32 %s143, %s144
          %s146 = smul.addr %s145, 16
          %s147 = scalar_lea.hbm %s0, %s146
          %s148 = sshll.u32 %s139, 4
          %s149 = int_to_ptr.vmem [resolvable:$true] %s148
          %154 = dma.hbm_to_vmem [thread:$0]  %s147, 128, %s149, %s136, 32, 32, 2
        $region20: #{tpu_custom_call.1} parent=15 // pred_fallthru
          _
        // Predicated region
        $region21: #{tpu_custom_call.1} parent=15 // pred_check
          %p155 = pneg %p79
        $region22: #{tpu_custom_call.1} parent=15 // pred_check_branch
          %157 = sbr.rel (%p155) target = $region24
        $region23: #{tpu_custom_call.1} parent=15 // pred_region
          %s158 = sand.u32 %s69, 1
          %s159 = scalar_lea.sflag [#allocation6], %s158
          %s160 = sand.u32 %s69, 1
          %s161 = smul.addr %s160, 2
          %s162 = scalar_lea.vmem [#allocation5], %s161
          %s164 = ssub.s32 32, 32
          %165 = vsyncadd %s159, %s164
          %s166 = smul.addr %s25, 2
          %s167 = smul.addr %s24, 2
          %s168 = sadd.s32 %s166, %s167
          %s169 = smul.addr %s168, 16
          %s170 = scalar_lea.hbm %s1, %s169
          %s172 = sshll.u32 %s162, 4
          %s173 = int_to_ptr.vmem [resolvable:$true] %s172
          %175 = dma.hbm_to_vmem [thread:$0]  %s170, 32, %s173, %s159
        $region24: #{tpu_custom_call.1} parent=15 // pred_fallthru
          _
      $region16: #{tpu_custom_call.1} parent=5 // pred_fallthru
        _
      %p176 = scmp.le.s32.totalorder 1, %s17
      %p177 = scmp.lt.s32.totalorder %s17, 3
      %p178 = pnand %p176, %p177
      %p179 = pneg %p178
      // Predicated region
      $region25: #{tpu_custom_call.1} parent=5 // pred_check
        _
      $region26: #{tpu_custom_call.1} parent=5 // pred_check_branch
        %181 = sbr.rel (%p178) target = $region28
      $region27: #{tpu_custom_call.1} parent=5 // pred_region
        %s182 = ssub.s32 %s17, 1
        %s183 = sand.u32 %s44, 1
        %s184 = scalar_lea.sflag [#allocation3], %s183
        %s185 = sand.u32 %s44, 1
        %s186 = smul.addr %s185, 8
        %s187 = scalar_lea.vmem [#allocation2], %s186
        // Predicated region
        $region29: #{tpu_custom_call.1} parent=27 // pred_check
          %p188 = pneg %p57
        $region30: #{tpu_custom_call.1} parent=27 // pred_check_branch
          %190 = sbr.rel (%p188) target = $region32
        $region31: #{tpu_custom_call.1} parent=27 // pred_region
          %191 = dma.done %s184, 128
        $region32: #{tpu_custom_call.1} parent=27 // pred_fallthru
          _
        %s192 = sand.u32 %s72, 1
        %s193 = scalar_lea.sflag [#allocation6], %s192
        %s194 = sand.u32 %s72, 1
        %s195 = smul.addr %s194, 2
        %s196 = scalar_lea.vmem [#allocation5], %s195
        // Predicated region
        $region33: #{tpu_custom_call.1} parent=27 // pred_check
          %p197 = pneg %p85
        $region34: #{tpu_custom_call.1} parent=27 // pred_check_branch
          %199 = sbr.rel (%p197) target = $region36
        $region35: #{tpu_custom_call.1} parent=27 // pred_region
          %200 = dma.done %s193, 32
        $region36: #{tpu_custom_call.1} parent=27 // pred_fallthru
          _
        %s201 = sand.u32 %s44, 1
        %s202 = scalar_lea.sflag [#allocation3], %s201
        %s203 = sand.u32 %s44, 1
        %s204 = smul.addr %s203, 8
        %s205 = scalar_lea.vmem [#allocation2], %s204
        %p206 = pneg %p57
        %p207 = pneg %p54
        %s208 = sand.u32 %s72, 1
        %s209 = scalar_lea.sflag [#allocation6], %s208
        %s210 = sand.u32 %s72, 1
        %s211 = smul.addr %s210, 2
        %s212 = scalar_lea.vmem [#allocation5], %s211
        %p213 = pneg %p85
        %p214 = pneg %p82
        %p215 = pneg %p113
        %p216 = pneg %p110
        %s217 = sand.u32 %s100, 1
        %s218 = scalar_lea.sflag [#allocation4], %s217
        %s219 = sand.u32 %s100, 1
        %s220 = smul.addr %s219, 2
        %s221 = scalar_lea.vmem [#allocation7], %s220
        %v222 = vlaneseq
        %vm223 = vcmp.ge.s32.totalorder %v222, 0
        %vm224 = vcmp.lt.s32.totalorder %v222, 256
        %vm225 = vmand %vm223, %vm224
        %226 = vst.msk [vmem:[%s221] sm:$0x3] %vm225, 0.0
        %v227 = vld [vmem:[%s196] sm:$0x3]
        %vm228 = vcmp.ne.s32.totalorder %v227, 4294967196
        %v229 = vld [vmem:[%s187] sm:$0x3]
        %s230 = scalar_lea.vmem %s187, 2 [#allocation2]
        %v231 = vld [vmem:[%s230] sm:$0x3]
        %v232 = vmax.f32 %v229, %v231
        %s233 = scalar_lea.vmem %s187, 4 [#allocation2]
        %v234 = vld [vmem:[%s233] sm:$0x3]
        %v235 = vmax.f32 %v232, %v234
        %s236 = scalar_lea.vmem %s187, 6 [#allocation2]
        %v237 = vld [vmem:[%s236] sm:$0x3]
        %v238 = vmax.f32 %v235, %v237
        %v239 = vsub.f32 %v229, %v238
        %v240 = vmul.f32 %v239, 1.442695
        %v241 = vpow.pop %v240
        %v242 = vadd.f32 %v241, 0.0
        %vm243 = vcmp.eq.s32.totalorder %v227, 0
        %v244 = vsel %vm243, %v229, 0.0
        %v245 = vsub.f32 %v231, %v238
        %v246 = vmul.f32 %v245, 1.442695
        %v247 = vpow.pop %v246
        %v248 = vadd.f32 %v242, %v247
        %vm249 = vcmp.eq.s32.totalorder %v227, 1
        %v250 = vsel %vm249, %v231, %v244
        %v251 = vsub.f32 %v234, %v238
        %v252 = vmul.f32 %v251, 1.442695
        %v253 = vpow.pop %v252
        %v254 = vadd.f32 %v248, %v253
        %vm255 = vcmp.eq.s32.totalorder %v227, 2
        %v256 = vsel %vm255, %v234, %v250
        %v257 = vsub.f32 %v237, %v238
        %v258 = vmul.f32 %v257, 1.442695
        %v259 = vpow.pop %v258
        %v260 = vadd.f32 %v254, %v259
        %vm261 = vcmp.eq.s32.totalorder %v227, 3
        %v262 = vsel %vm261, %v237, %v256
        %v263 = vlog2.pop %v260
        %v264 = vmul.f32 %v263, 0.6931472
        %v265 = vadd.f32 %v238, %v264
        %v266 = vsub.f32 %v265, %v262
        %v267 = vsel %vm228, %v266, 0.0
        %v268 = vld [vmem:[%s221] sm:$0x3]
        %v269 = vadd.f32 %v268, %v267
        %270 = vst.msk [vmem:[%s221] sm:$0x3] %vm225, %v269
        %s271 = sand.u32 %s100, 1
        %s272 = scalar_lea.sflag [#allocation4], %s271
        %s273 = sand.u32 %s100, 1
        %s274 = smul.addr %s273, 2
        %s275 = scalar_lea.vmem [#allocation7], %s274
        // Predicated region
        $region37: #{tpu_custom_call.1} parent=27 // pred_check
          %p276 = pneg %p110
        $region38: #{tpu_custom_call.1} parent=27 // pred_check_branch
          %278 = sbr.rel (%p276) target = $region40
        $region39: #{tpu_custom_call.1} parent=27 // pred_region
          %s280 = ssub.s32 32, 32
          %281 = vsyncadd %s272, %s280
          %s282 = smul.addr %s27, 2
          %s283 = smul.addr %s26, 2
          %s284 = sadd.s32 %s282, %s283
          %s285 = smul.addr %s284, 16
          %s286 = scalar_lea.hbm %s2, %s285
          %s288 = sshll.u32 %s275, 4
          %s289 = int_to_ptr.vmem [resolvable:$true] %s288
          %291 = dma.vmem_to_hbm [thread:$0]  %s289, 32, %s286, %s272
        $region40: #{tpu_custom_call.1} parent=27 // pred_fallthru
          _
      $region28: #{tpu_custom_call.1} parent=5 // pred_fallthru
        _
      %p292 = scmp.le.s32.totalorder 2, %s17
      // Predicated region
      $region41: #{tpu_custom_call.1} parent=5 // pred_check
        %p293 = pneg %p292
      $region42: #{tpu_custom_call.1} parent=5 // pred_check_branch
        %295 = sbr.rel (%p293) target = $region44
      $region43: #{tpu_custom_call.1} parent=5 // pred_region
        %s296 = ssub.s32 %s17, 2
        // Predicated region
        $region45: #{tpu_custom_call.1} parent=43 // pred_check
          %p297 = pneg %p116
        $region46: #{tpu_custom_call.1} parent=43 // pred_check_branch
          %299 = sbr.rel (%p297) target = $region48
        $region47: #{tpu_custom_call.1} parent=43 // pred_region
          %s300 = sand.u32 %s101, 1
          %s301 = scalar_lea.sflag [#allocation4], %s300
          %s302 = sand.u32 %s101, 1
          %s303 = smul.addr %s302, 2
          %s304 = scalar_lea.vmem [#allocation7], %s303
          %305 = dma.done %s301, 32
        $region48: #{tpu_custom_call.1} parent=43 // pred_fallthru
          _
      $region44: #{tpu_custom_call.1} parent=5 // pred_fallthru
        _
    $region6: #{tpu_custom_call.1} parent=1 // loop_footer
      %s21 = sadd.s32 1, %s17
    $region7: #{tpu_custom_call.1} parent=1 // loop_footer_branch
      %16 = sbr.rel target = $region3
    $region8: #{tpu_custom_call.1} parent=1 // loop_exit
      _
    %306 = vsyncpa [#allocation3], 1
    %s307 = scalar_lea.sflag [#allocation3], 1
    %308 = vsyncpa %s307, 1
    %309 = vsyncpa [#allocation6], 1
    %s310 = scalar_lea.sflag [#allocation6], 1
    %311 = vsyncpa %s310, 1
    %312 = vsyncpa [#allocation4], 1
    %s313 = scalar_lea.sflag [#allocation4], 1
    %314 = vsyncpa %s313, 1

</llo_original>
